<compile_context>
chip_gen: v5e
topology: v5e:2x2
jax: 0.10.0
libtpu: 0.0.40
codegen_flags: <defaults>
</compile_context>

<pallas_src>
import functools
import math

import jax
import jax.numpy as jnp
from jax.experimental import pallas as pl
from jax.experimental.pallas import tpu as pltpu


def _fused_tcn_kernel(x_ref, *refs, layers, compute_dtype):
    """Full TCN stack for ONE batch element, entirely in VMEM.

    x_ref   : (L, C_in0)                 raw input, native (time, feature) layout
    refs    : w_0, b_0, ..., w_{n-1}, b_{n-1}, o_ref, col_ref
      w_i   : (K_i * C_in_i, C_out_i)    tap-stacked weight matrix (compute_dtype)
      b_i   : (1, C_out_i)               bias (f32)
      o_ref : (L, hidden)                output of the last layer
      col_ref: (L, max_i K_i*C_in_i) f32 scratch staging the causal im2col matrix
    """
    n_layers = len(layers)
    o_ref = refs[2 * n_layers]
    col_ref = refs[2 * n_layers + 1]
    l = x_ref.shape[0]

    h = x_ref[...].astype(jnp.float32)                     # (L, C_in0) activations
    for i, (k, dil, c_in, c_out) in enumerate(layers):
        w_ref = refs[2 * i]
        b_ref = refs[2 * i + 1]
        p = (k - 1) * dil                                  # causal pad == chomp size
        kc = k * c_in

        # Stage the causal im2col matrix:
        #   col[t, j*C_in + c] = h[t - (k-1-j)*dil, c]   (0 where the index < 0)
        # Only the first p rows can need zeros (largest tap shift); each tap then
        # overwrites its valid rows.  The chomped tail is never computed.
        if p > 0:
            col_ref[0:p, 0:kc] = jnp.zeros((p, kc), jnp.float32)
        for j in range(k):                                 # static unroll over taps
            shift = (k - 1 - j) * dil
            col_ref[shift:l, j * c_in:(j + 1) * c_in] = h[0:l - shift, :]

        # One MXU matmul per layer: contraction dim K*C_in, bf16 operands,
        # f32 accumulation; bias + ReLU fused on the result.
        lhs = col_ref[:, 0:kc].astype(compute_dtype)
        y = jnp.dot(lhs, w_ref[...], preferred_element_type=jnp.float32)
        h = jnp.maximum(y + b_ref[...], 0.0)               # (L, C_out) f32

    o_ref[...] = h.astype(o_ref.dtype)


def inner_encoder_forward(x, params, *, compute_dtype=jnp.bfloat16):
    """InnerEncoder.forward: x (N, L, input_size) -> (N, L, hidden_size).

    One fused pallas_call over the whole ConvNet stack (pooling=False);
    nn.Dropout is identity at inference.  Set compute_dtype=jnp.float32 for
    strict f32 MXU operands (default bf16 operands / f32 accumulation).
    """
    n, l, c_in0 = x.shape

    layers = []
    weight_args = []
    for layer in params:
        w, b, dil = layer["w"], layer["b"], layer["dilation"]
        c_out, c_in, k = w.shape
        # w_mat[j*C_in + c, o] = w[o, c, j]  (tap-major rows matching the im2col)
        w_mat = jnp.transpose(w, (2, 1, 0)).reshape(k * c_in, c_out).astype(compute_dtype)
        b_row = b.reshape(1, c_out).astype(jnp.float32)
        weight_args += [w_mat, b_row]
        layers.append((int(k), int(dil), int(c_in), int(c_out)))
    flat_inputs = [x] + weight_args
    hidden = layers[-1][3]
    max_kc = max(k * ci for (k, _, ci, _) in layers)

    kernel = functools.partial(_fused_tcn_kernel, layers=tuple(layers),
                               compute_dtype=compute_dtype)

    flops = int(sum(2 * n * l * k * ci * co for (k, _, ci, co) in layers))
    bytes_accessed = int(
        x.size * x.dtype.itemsize
        + sum(a.size * a.dtype.itemsize for a in weight_args)
        + n * l * hidden * x.dtype.itemsize)

    def build_call(weight_pipeline_mode):
        wb_kwargs = ({} if weight_pipeline_mode is None
                     else {"pipeline_mode": weight_pipeline_mode})
        in_specs = [pl.BlockSpec((None, l, c_in0), lambda bi: (bi, 0, 0))]
        for (k, _, c_in, c_out) in layers:
            # Full-array blocks with constant index_map (grid-invariant operands).
            in_specs.append(pl.BlockSpec((k * c_in, c_out), lambda bi: (0, 0), **wb_kwargs))
            in_specs.append(pl.BlockSpec((1, c_out), lambda bi: (0, 0), **wb_kwargs))
        return pl.pallas_call(
            kernel,
            out_shape=jax.ShapeDtypeStruct((n, l, hidden), x.dtype),
            grid_spec=pltpu.PrefetchScalarGridSpec(
                num_scalar_prefetch=0,
                grid=(n,),
                in_specs=in_specs,
                out_specs=pl.BlockSpec((None, l, hidden), lambda bi: (bi, 0, 0)),
                scratch_shapes=[pltpu.VMEM((l, max_kc), jnp.float32)],
            ),
            compiler_params=pltpu.CompilerParams(
                dimension_semantics=("parallel",),
            ),
            cost_estimate=pl.CostEstimate(
                flops=flops, transcendentals=0, bytes_accessed=bytes_accessed),
        )

    try:
        # Grid-invariant weights/biases: single-buffer them (constant index_map),
        # freeing the VMEM a redundant second pipeline buffer would use.
        return build_call(pl.Buffered(1))(*flat_inputs)
    except Exception:
        # Fallback if this Pallas version rejects Buffered(1) on these specs.
        return build_call(None)(*flat_inputs)


def init_inner_encoder_params(key, input_size, inner_hidden_sizes,
                              inner_kernel_sizes, hidden_size, dilation_base=2):
    """Mirrors InnerEncoder.__init__ / ConvNet.__init__ parameter shapes."""
    temporal_dims = list(inner_hidden_sizes)
    temporal_dims[-1] = hidden_size                        # as in InnerEncoder
    assert len(temporal_dims) == len(inner_kernel_sizes)
    params = []
    in_ch = input_size
    for i, (out_ch, k) in enumerate(zip(temporal_dims, inner_kernel_sizes)):
        key, wk, bk = jax.random.split(key, 3)
        bound = 1.0 / math.sqrt(in_ch * k)                 # PyTorch Conv1d default init
        w = jax.random.uniform(wk, (out_ch, in_ch, k), jnp.float32, -bound, bound)
        b = jax.random.uniform(bk, (out_ch,), jnp.float32, -bound, bound)
        params.append({"w": w, "b": b, "dilation": dilation_base ** i})
        in_ch = out_ch
    return params


def _reference_forward(x, params, *, compute_dtype=None):
    """Pure-JAX reference mirroring the PyTorch module op-for-op:
    Conv1d(padding=p, dilation=d) -> ReLU -> Chomp1d(p) per layer.

    If compute_dtype is given, conv operands are cast to it (f32 accumulation),
    matching the Pallas kernel's MXU precision path.
    """
    y = jnp.transpose(x, (0, 2, 1)).astype(jnp.float32)    # (N, C, L)
    for layer in params:
        w, b, d = layer["w"], layer["b"], layer["dilation"]
        k = w.shape[-1]
        p = (k - 1) * d
        l = y.shape[-1]
        lhs, rhs = y, w
        if compute_dtype is not None:
            lhs = lhs.astype(compute_dtype)
            rhs = rhs.astype(compute_dtype)
        conv = jax.lax.conv_general_dilated(
            lhs, rhs, window_strides=(1,), padding=[(p, p)], rhs_dilation=(d,),
            dimension_numbers=("NCH", "OIH", "NCH"),
            preferred_element_type=jnp.float32,
            precision=jax.lax.Precision.HIGHEST)
        conv = conv + b[None, :, None].astype(jnp.float32)
        conv = jnp.maximum(conv, 0.0)
        y = conv[:, :, :l]                                 # Chomp1d(p)
    return jnp.transpose(y, (0, 2, 1))


if __name__ == "__main__":
    key = jax.random.PRNGKey(0)
    # Small shapes consistent with InnerEncoder: batch=2, seq=16, features=8,
    # two TCN layers (dilations 1, 2), hidden_size=32.
    N, L, D_IN = 2, 16, 8
    kwargs = dict(inner_hidden_sizes=[16, 32], inner_kernel_sizes=[3, 3],
                  inner_dropout=0.0, hidden_size=32)

    key, pkey, xkey = jax.random.split(key, 3)
    params = init_inner_encoder_params(
        pkey, D_IN, kwargs["inner_hidden_sizes"],
        kwargs["inner_kernel_sizes"], kwargs["hidden_size"])
    x = jax.random.normal(xkey, (N, L, D_IN), dtype=jnp.float32)

    out = inner_encoder_forward(x, params)
    out = jax.block_until_ready(out)

    assert out.shape == (N, L, kwargs["hidden_size"]), out.shape
    assert out.dtype == x.dtype

    # Tight check vs. a reference using the same bf16-operand / f32-accumulation
    # precision as the kernel (validates the causal pad / tap-index / im2col math).
    ref_matched = _reference_forward(x, params, compute_dtype=jnp.bfloat16)
    assert jnp.allclose(out, ref_matched, rtol=1e-3, atol=1e-3), float(
        jnp.max(jnp.abs(out - ref_matched)))

    # Loose check vs. the strict-f32 PyTorch-equivalent reference (difference is
    # bounded by bf16 operand rounding).
    ref_f32 = _reference_forward(x, params)
    assert jnp.allclose(out, ref_f32, rtol=5e-2, atol=5e-2), float(
        jnp.max(jnp.abs(out - ref_f32)))

    print("KERNEL_OK")
</pallas_src>

<mosaic_0001>
module attributes {stable_mosaic.version = 11 : i64} {
  func.func @_fused_tcn_kernel(%arg0: i32, %arg1: memref<1x16x8xf32, #tpu.memory_space<vmem>>, %arg2: memref<24x16xbf16, #tpu.memory_space<vmem>>, %arg3: memref<1x16xf32, #tpu.memory_space<vmem>>, %arg4: memref<48x32xbf16, #tpu.memory_space<vmem>>, %arg5: memref<1x32xf32, #tpu.memory_space<vmem>>, %arg6: memref<1x16x32xf32, #tpu.memory_space<vmem>>, %arg7: memref<16x48xf32, #tpu.memory_space<vmem>>) attributes {dimension_semantics = [#tpu.dimension_semantics<parallel>], iteration_bounds = array<i64: 2>, scalar_prefetch = 0 : i64, scratch_operands = 1 : i64, tpu.core_type = #tpu.core_type<tc>, window_params = [{transform_indices = @transform_0, window_bounds = array<i64: 1, 16, 8>}, {pipeline_mode = #tpu.pipeline_mode<synchronous>, transform_indices = @transform_1, window_bounds = array<i64: 24, 16>}, {pipeline_mode = #tpu.pipeline_mode<synchronous>, transform_indices = @transform_2, window_bounds = array<i64: 1, 16>}, {pipeline_mode = #tpu.pipeline_mode<synchronous>, transform_indices = @transform_3, window_bounds = array<i64: 48, 32>}, {pipeline_mode = #tpu.pipeline_mode<synchronous>, transform_indices = @transform_4, window_bounds = array<i64: 1, 32>}, {transform_indices = @transform_5, window_bounds = array<i64: 1, 16, 32>}]} {
    %c0 = arith.constant 0 : index
    %c0_0 = arith.constant 0 : index
    %c0_1 = arith.constant 0 : index
    %0 = vector.load %arg1[%c0, %c0_0, %c0_1] : memref<1x16x8xf32, #tpu.memory_space<vmem>>, vector<1x16x8xf32>
    %1 = vector.shape_cast %0 : vector<1x16x8xf32> to vector<16x8xf32>
    %cst = arith.constant 0.000000e+00 : f32
    %2 = vector.broadcast %cst : f32 to vector<2x24xf32>
    %c0_2 = arith.constant 0 : index
    %c0_3 = arith.constant 0 : index
    %3 = vector.load %arg7[%c0_2, %c0_3] : memref<16x48xf32, #tpu.memory_space<vmem>>, vector<2x24xf32>
    tpu.vector_store %arg7[%c0_2, %c0_3], %2 {strides = array<i32>} : memref<16x48xf32, #tpu.memory_space<vmem>>, vector<2x24xf32>,
    %4 = vector.extract_strided_slice %1 {offsets = [0, 0], sizes = [14, 8], strides = [1, 1]} : vector<16x8xf32> to vector<14x8xf32>
    %c2 = arith.constant 2 : index
    %c0_4 = arith.constant 0 : index
    %5 = vector.load %arg7[%c2, %c0_4] : memref<16x48xf32, #tpu.memory_space<vmem>>, vector<14x8xf32>
    tpu.vector_store %arg7[%c2, %c0_4], %4 {strides = array<i32>} : memref<16x48xf32, #tpu.memory_space<vmem>>, vector<14x8xf32>,
    %6 = vector.extract_strided_slice %1 {offsets = [0, 0], sizes = [15, 8], strides = [1, 1]} : vector<16x8xf32> to vector<15x8xf32>
    %c1 = arith.constant 1 : index
    %c8 = arith.constant 8 : index
    %7 = vector.load %arg7[%c1, %c8] : memref<16x48xf32, #tpu.memory_space<vmem>>, vector<15x8xf32>
    tpu.vector_store %arg7[%c1, %c8], %6 {strides = array<i32>} : memref<16x48xf32, #tpu.memory_space<vmem>>, vector<15x8xf32>,
    %c0_5 = arith.constant 0 : index
    %c16 = arith.constant 16 : index
    %8 = vector.load %arg7[%c0_5, %c16] : memref<16x48xf32, #tpu.memory_space<vmem>>, vector<16x8xf32>
    tpu.vector_store %arg7[%c0_5, %c16], %1 {strides = array<i32>} : memref<16x48xf32, #tpu.memory_space<vmem>>, vector<16x8xf32>,
    %c0_6 = arith.constant 0 : index
    %c0_7 = arith.constant 0 : index
    %9 = vector.load %arg7[%c0_6, %c0_7] : memref<16x48xf32, #tpu.memory_space<vmem>>, vector<16x24xf32>
    %10 = arith.truncf %9 : vector<16x24xf32> to vector<16x24xbf16>
    %c0_8 = arith.constant 0 : index
    %c0_9 = arith.constant 0 : index
    %11 = vector.load %arg2[%c0_8, %c0_9] : memref<24x16xbf16, #tpu.memory_space<vmem>>, vector<24x16xbf16>
    %cst_10 = arith.constant dense<0.000000e+00> : vector<16x16xf32>
    %12 = tpu.matmul %10, %11, %cst_10 {dimension_numbers = #tpu.dot_dimension_numbers<[1], [0], [0], [1], [0, 0, 1, 1], [], []>} : vector<16x24xbf16>, vector<24x16xbf16>, vector<16x16xf32> -> vector<16x16xf32>
    %c0_11 = arith.constant 0 : index
    %c0_12 = arith.constant 0 : index
    %13 = vector.load %arg3[%c0_11, %c0_12] : memref<1x16xf32, #tpu.memory_space<vmem>>, vector<1x16xf32>
    %14 = vector.broadcast %13 : vector<1x16xf32> to vector<16x16xf32>
    %15 = arith.addf %12, %14 : vector<16x16xf32>
    %cst_13 = arith.constant 0.000000e+00 : f32
    %16 = vector.broadcast %cst_13 : f32 to vector<16x16xf32>
    %17 = arith.maximumf %15, %16 : vector<16x16xf32>
    %cst_14 = arith.constant 0.000000e+00 : f32
    %18 = vector.broadcast %cst_14 : f32 to vector<4x48xf32>
    %c0_15 = arith.constant 0 : index
    %c0_16 = arith.constant 0 : index
    %19 = vector.load %arg7[%c0_15, %c0_16] : memref<16x48xf32, #tpu.memory_space<vmem>>, vector<4x48xf32>
    tpu.vector_store %arg7[%c0_15, %c0_16], %18 {strides = array<i32>} : memref<16x48xf32, #tpu.memory_space<vmem>>, vector<4x48xf32>,
    %20 = vector.extract_strided_slice %17 {offsets = [0, 0], sizes = [12, 16], strides = [1, 1]} : vector<16x16xf32> to vector<12x16xf32>
    %c4 = arith.constant 4 : index
    %c0_17 = arith.constant 0 : index
    %21 = vector.load %arg7[%c4, %c0_17] : memref<16x48xf32, #tpu.memory_space<vmem>>, vector<12x16xf32>
    tpu.vector_store %arg7[%c4, %c0_17], %20 {strides = array<i32>} : memref<16x48xf32, #tpu.memory_space<vmem>>, vector<12x16xf32>,
    %22 = vector.extract_strided_slice %17 {offsets = [0, 0], sizes = [14, 16], strides = [1, 1]} : vector<16x16xf32> to vector<14x16xf32>
    %c2_18 = arith.constant 2 : index
    %c16_19 = arith.constant 16 : index
    %23 = vector.load %arg7[%c2_18, %c16_19] : memref<16x48xf32, #tpu.memory_space<vmem>>, vector<14x16xf32>
    tpu.vector_store %arg7[%c2_18, %c16_19], %22 {strides = array<i32>} : memref<16x48xf32, #tpu.memory_space<vmem>>, vector<14x16xf32>,
    %c0_20 = arith.constant 0 : index
    %c32 = arith.constant 32 : index
    %24 = vector.load %arg7[%c0_20, %c32] : memref<16x48xf32, #tpu.memory_space<vmem>>, vector<16x16xf32>
    tpu.vector_store %arg7[%c0_20, %c32], %17 {strides = array<i32>} : memref<16x48xf32, #tpu.memory_space<vmem>>, vector<16x16xf32>,
    %c0_21 = arith.constant 0 : index
    %c0_22 = arith.constant 0 : index
    %25 = vector.load %arg7[%c0_21, %c0_22] : memref<16x48xf32, #tpu.memory_space<vmem>>, vector<16x48xf32>
    %26 = arith.truncf %25 : vector<16x48xf32> to vector<16x48xbf16>
    %c0_23 = arith.constant 0 : index
    %c0_24 = arith.constant 0 : index
    %27 = vector.load %arg4[%c0_23, %c0_24] : memref<48x32xbf16, #tpu.memory_space<vmem>>, vector<48x32xbf16>
    %cst_25 = arith.constant dense<0.000000e+00> : vector<16x32xf32>
    %28 = tpu.matmul %26, %27, %cst_25 {dimension_numbers = #tpu.dot_dimension_numbers<[1], [0], [0], [1], [0, 0, 1, 1], [], []>} : vector<16x48xbf16>, vector<48x32xbf16>, vector<16x32xf32> -> vector<16x32xf32>
    %c0_26 = arith.constant 0 : index
    %c0_27 = arith.constant 0 : index
    %29 = vector.load %arg5[%c0_26, %c0_27] : memref<1x32xf32, #tpu.memory_space<vmem>>, vector<1x32xf32>
    %30 = vector.broadcast %29 : vector<1x32xf32> to vector<16x32xf32>
    %31 = arith.addf %28, %30 : vector<16x32xf32>
    %cst_28 = arith.constant 0.000000e+00 : f32
    %32 = vector.broadcast %cst_28 : f32 to vector<16x32xf32>
    %33 = arith.maximumf %31, %32 : vector<16x32xf32>
    %c0_29 = arith.constant 0 : index
    %c0_30 = arith.constant 0 : index
    %c0_31 = arith.constant 0 : index
    %34 = vector.load %arg6[%c0_29, %c0_30, %c0_31] : memref<1x16x32xf32, #tpu.memory_space<vmem>>, vector<1x16x32xf32>
    %35 = vector.shape_cast %34 : vector<1x16x32xf32> to vector<16x32xf32>
    %36 = vector.shape_cast %33 : vector<16x32xf32> to vector<1x16x32xf32>
    tpu.vector_store %arg6[%c0_29, %c0_30, %c0_31], %36 {strides = array<i32>} : memref<1x16x32xf32, #tpu.memory_space<vmem>>, vector<1x16x32xf32>,
    return
  }
  func.func @transform_0(%arg0: i32) -> (i32, i32, i32) {
    %c0_i32 = arith.constant 0 : i32
    %c0_i32_0 = arith.constant 0 : i32
    %c0_i32_1 = arith.constant 0 : i32
    return %arg0, %c0_i32, %c0_i32_0 : i32, i32, i32
  }
  func.func @transform_1(%arg0: i32) -> (i32, i32) {
    %c0_i32 = arith.constant 0 : i32
    %c0_i32_0 = arith.constant 0 : i32
    %c0_i32_1 = arith.constant 0 : i32
    return %c0_i32, %c0_i32_0 : i32, i32
  }
  func.func @transform_2(%arg0: i32) -> (i32, i32) {
    %c0_i32 = arith.constant 0 : i32
    %c0_i32_0 = arith.constant 0 : i32
    %c0_i32_1 = arith.constant 0 : i32
    return %c0_i32, %c0_i32_0 : i32, i32
  }
  func.func @transform_3(%arg0: i32) -> (i32, i32) {
    %c0_i32 = arith.constant 0 : i32
    %c0_i32_0 = arith.constant 0 : i32
    %c0_i32_1 = arith.constant 0 : i32
    return %c0_i32, %c0_i32_0 : i32, i32
  }
  func.func @transform_4(%arg0: i32) -> (i32, i32) {
    %c0_i32 = arith.constant 0 : i32
    %c0_i32_0 = arith.constant 0 : i32
    %c0_i32_1 = arith.constant 0 : i32
    return %c0_i32, %c0_i32_0 : i32, i32
  }
  func.func @transform_5(%arg0: i32) -> (i32, i32, i32) {
    %c0_i32 = arith.constant 0 : i32
    %c0_i32_0 = arith.constant 0 : i32
    %c0_i32_1 = arith.constant 0 : i32
    return %arg0, %c0_i32, %c0_i32_0 : i32, i32, i32
  }
}

module attributes {stable_mosaic.version = 11 : i64} {
  func.func @_fused_tcn_kernel(%arg0: i32, %arg1: memref<1x16x8xf32, #tpu.memory_space<vmem>>, %arg2: memref<24x16xbf16, #tpu.memory_space<vmem>>, %arg3: memref<1x16xf32, #tpu.memory_space<vmem>>, %arg4: memref<48x32xbf16, #tpu.memory_space<vmem>>, %arg5: memref<1x32xf32, #tpu.memory_space<vmem>>, %arg6: memref<1x16x32xf32, #tpu.memory_space<vmem>>, %arg7: memref<16x48xf32, #tpu.memory_space<vmem>>) attributes {dimension_semantics = [#tpu.dimension_semantics<parallel>], iteration_bounds = array<i64: 2>, scalar_prefetch = 0 : i64, scratch_operands = 1 : i64, tpu.core_type = #tpu.core_type<tc>, window_params = [{transform_indices = @transform_0, window_bounds = array<i64: 1, 16, 8>}, {pipeline_mode = #tpu.pipeline_mode<synchronous>, transform_indices = @transform_1, window_bounds = array<i64: 24, 16>}, {pipeline_mode = #tpu.pipeline_mode<synchronous>, transform_indices = @transform_2, window_bounds = array<i64: 1, 16>}, {pipeline_mode = #tpu.pipeline_mode<synchronous>, transform_indices = @transform_3, window_bounds = array<i64: 48, 32>}, {pipeline_mode = #tpu.pipeline_mode<synchronous>, transform_indices = @transform_4, window_bounds = array<i64: 1, 32>}, {transform_indices = @transform_5, window_bounds = array<i64: 1, 16, 32>}]} {
    %c0 = arith.constant 0 : index
    %c0_0 = arith.constant 0 : index
    %c0_1 = arith.constant 0 : index
    %0 = vector.load %arg1[%c0, %c0_0, %c0_1] : memref<1x16x8xf32, #tpu.memory_space<vmem>>, vector<1x16x8xf32>
    %1 = vector.shape_cast %0 : vector<1x16x8xf32> to vector<16x8xf32>
    %cst = arith.constant 0.000000e+00 : f32
    %2 = vector.broadcast %cst : f32 to vector<2x24xf32>
    %c0_2 = arith.constant 0 : index
    %c0_3 = arith.constant 0 : index
    %3 = vector.load %arg7[%c0_2, %c0_3] : memref<16x48xf32, #tpu.memory_space<vmem>>, vector<2x24xf32>
    tpu.vector_store %arg7[%c0_2, %c0_3], %2 {strides = array<i32>} : memref<16x48xf32, #tpu.memory_space<vmem>>, vector<2x24xf32>,
    %4 = vector.extract_strided_slice %1 {offsets = [0, 0], sizes = [14, 8], strides = [1, 1]} : vector<16x8xf32> to vector<14x8xf32>
    %c2 = arith.constant 2 : index
    %c0_4 = arith.constant 0 : index
    %5 = vector.load %arg7[%c2, %c0_4] : memref<16x48xf32, #tpu.memory_space<vmem>>, vector<14x8xf32>
    tpu.vector_store %arg7[%c2, %c0_4], %4 {strides = array<i32>} : memref<16x48xf32, #tpu.memory_space<vmem>>, vector<14x8xf32>,
    %6 = vector.extract_strided_slice %1 {offsets = [0, 0], sizes = [15, 8], strides = [1, 1]} : vector<16x8xf32> to vector<15x8xf32>
    %c1 = arith.constant 1 : index
    %c8 = arith.constant 8 : index
    %7 = vector.load %arg7[%c1, %c8] : memref<16x48xf32, #tpu.memory_space<vmem>>, vector<15x8xf32>
    tpu.vector_store %arg7[%c1, %c8], %6 {strides = array<i32>} : memref<16x48xf32, #tpu.memory_space<vmem>>, vector<15x8xf32>,
    %c0_5 = arith.constant 0 : index
    %c16 = arith.constant 16 : index
    %8 = vector.load %arg7[%c0_5, %c16] : memref<16x48xf32, #tpu.memory_space<vmem>>, vector<16x8xf32>
    tpu.vector_store %arg7[%c0_5, %c16], %1 {strides = array<i32>} : memref<16x48xf32, #tpu.memory_space<vmem>>, vector<16x8xf32>,
    %c0_6 = arith.constant 0 : index
    %c0_7 = arith.constant 0 : index
    %9 = vector.load %arg7[%c0_6, %c0_7] : memref<16x48xf32, #tpu.memory_space<vmem>>, vector<16x24xf32>
    %10 = arith.truncf %9 : vector<16x24xf32> to vector<16x24xbf16>
    %c0_8 = arith.constant 0 : index
    %c0_9 = arith.constant 0 : index
    %11 = vector.load %arg2[%c0_8, %c0_9] : memref<24x16xbf16, #tpu.memory_space<vmem>>, vector<24x16xbf16>
    %cst_10 = arith.constant dense<0.000000e+00> : vector<16x16xf32>
    %12 = tpu.matmul %10, %11, %cst_10 {dimension_numbers = #tpu.dot_dimension_numbers<[1], [0], [0], [1], [0, 0, 1, 1], [], []>} : vector<16x24xbf16>, vector<24x16xbf16>, vector<16x16xf32> -> vector<16x16xf32>
    %c0_11 = arith.constant 0 : index
    %c0_12 = arith.constant 0 : index
    %13 = vector.load %arg3[%c0_11, %c0_12] : memref<1x16xf32, #tpu.memory_space<vmem>>, vector<1x16xf32>
    %14 = vector.broadcast %13 : vector<1x16xf32> to vector<16x16xf32>
    %15 = arith.addf %12, %14 : vector<16x16xf32>
    %cst_13 = arith.constant 0.000000e+00 : f32
    %16 = vector.broadcast %cst_13 : f32 to vector<16x16xf32>
    %17 = arith.maximumf %15, %16 : vector<16x16xf32>
    %cst_14 = arith.constant 0.000000e+00 : f32
    %18 = vector.broadcast %cst_14 : f32 to vector<4x48xf32>
    %c0_15 = arith.constant 0 : index
    %c0_16 = arith.constant 0 : index
    %19 = vector.load %arg7[%c0_15, %c0_16] : memref<16x48xf32, #tpu.memory_space<vmem>>, vector<4x48xf32>
    tpu.vector_store %arg7[%c0_15, %c0_16], %18 {strides = array<i32>} : memref<16x48xf32, #tpu.memory_space<vmem>>, vector<4x48xf32>,
    %20 = vector.extract_strided_slice %17 {offsets = [0, 0], sizes = [12, 16], strides = [1, 1]} : vector<16x16xf32> to vector<12x16xf32>
    %c4 = arith.constant 4 : index
    %c0_17 = arith.constant 0 : index
    %21 = vector.load %arg7[%c4, %c0_17] : memref<16x48xf32, #tpu.memory_space<vmem>>, vector<12x16xf32>
    tpu.vector_store %arg7[%c4, %c0_17], %20 {strides = array<i32>} : memref<16x48xf32, #tpu.memory_space<vmem>>, vector<12x16xf32>,
    %22 = vector.extract_strided_slice %17 {offsets = [0, 0], sizes = [14, 16], strides = [1, 1]} : vector<16x16xf32> to vector<14x16xf32>
    %c2_18 = arith.constant 2 : index
    %c16_19 = arith.constant 16 : index
    %23 = vector.load %arg7[%c2_18, %c16_19] : memref<16x48xf32, #tpu.memory_space<vmem>>, vector<14x16xf32>
    tpu.vector_store %arg7[%c2_18, %c16_19], %22 {strides = array<i32>} : memref<16x48xf32, #tpu.memory_space<vmem>>, vector<14x16xf32>,
    %c0_20 = arith.constant 0 : index
    %c32 = arith.constant 32 : index
    %24 = vector.load %arg7[%c0_20, %c32] : memref<16x48xf32, #tpu.memory_space<vmem>>, vector<16x16xf32>
    tpu.vector_store %arg7[%c0_20, %c32], %17 {strides = array<i32>} : memref<16x48xf32, #tpu.memory_space<vmem>>, vector<16x16xf32>,
    %c0_21 = arith.constant 0 : index
    %c0_22 = arith.constant 0 : index
    %25 = vector.load %arg7[%c0_21, %c0_22] : memref<16x48xf32, #tpu.memory_space<vmem>>, vector<16x48xf32>
    %26 = arith.truncf %25 : vector<16x48xf32> to vector<16x48xbf16>
    %c0_23 = arith.constant 0 : index
    %c0_24 = arith.constant 0 : index
    %27 = vector.load %arg4[%c0_23, %c0_24] : memref<48x32xbf16, #tpu.memory_space<vmem>>, vector<48x32xbf16>
    %cst_25 = arith.constant dense<0.000000e+00> : vector<16x32xf32>
    %28 = tpu.matmul %26, %27, %cst_25 {dimension_numbers = #tpu.dot_dimension_numbers<[1], [0], [0], [1], [0, 0, 1, 1], [], []>} : vector<16x48xbf16>, vector<48x32xbf16>, vector<16x32xf32> -> vector<16x32xf32>
    %c0_26 = arith.constant 0 : index
    %c0_27 = arith.constant 0 : index
    %29 = vector.load %arg5[%c0_26, %c0_27] : memref<1x32xf32, #tpu.memory_space<vmem>>, vector<1x32xf32>
    %30 = vector.broadcast %29 : vector<1x32xf32> to vector<16x32xf32>
    %31 = arith.addf %28, %30 : vector<16x32xf32>
    %cst_28 = arith.constant 0.000000e+00 : f32
    %32 = vector.broadcast %cst_28 : f32 to vector<16x32xf32>
    %33 = arith.maximumf %31, %32 : vector<16x32xf32>
    %c0_29 = arith.constant 0 : index
    %c0_30 = arith.constant 0 : index
    %c0_31 = arith.constant 0 : index
    %34 = vector.load %arg6[%c0_29, %c0_30, %c0_31] : memref<1x16x32xf32, #tpu.memory_space<vmem>>, vector<1x16x32xf32>
    %35 = vector.shape_cast %34 : vector<1x16x32xf32> to vector<16x32xf32>
    %36 = vector.shape_cast %33 : vector<16x32xf32> to vector<1x16x32xf32>
    tpu.vector_store %arg6[%c0_29, %c0_30, %c0_31], %36 {strides = array<i32>} : memref<1x16x32xf32, #tpu.memory_space<vmem>>, vector<1x16x32xf32>,
    return
  }
  func.func @transform_0(%arg0: i32) -> (i32, i32, i32) {
    %c0_i32 = arith.constant 0 : i32
    %c0_i32_0 = arith.constant 0 : i32
    %c0_i32_1 = arith.constant 0 : i32
    return %arg0, %c0_i32, %c0_i32_0 : i32, i32, i32
  }
  func.func @transform_1(%arg0: i32) -> (i32, i32) {
    %c0_i32 = arith.constant 0 : i32
    %c0_i32_0 = arith.constant 0 : i32
    %c0_i32_1 = arith.constant 0 : i32
    return %c0_i32, %c0_i32_0 : i32, i32
  }
  func.func @transform_2(%arg0: i32) -> (i32, i32) {
    %c0_i32 = arith.constant 0 : i32
    %c0_i32_0 = arith.constant 0 : i32
    %c0_i32_1 = arith.constant 0 : i32
    return %c0_i32, %c0_i32_0 : i32, i32
  }
  func.func @transform_3(%arg0: i32) -> (i32, i32) {
    %c0_i32 = arith.constant 0 : i32
    %c0_i32_0 = arith.constant 0 : i32
    %c0_i32_1 = arith.constant 0 : i32
    return %c0_i32, %c0_i32_0 : i32, i32
  }
  func.func @transform_4(%arg0: i32) -> (i32, i32) {
    %c0_i32 = arith.constant 0 : i32
    %c0_i32_0 = arith.constant 0 : i32
    %c0_i32_1 = arith.constant 0 : i32
    return %c0_i32, %c0_i32_0 : i32, i32
  }
  func.func @transform_5(%arg0: i32) -> (i32, i32, i32) {
    %c0_i32 = arith.constant 0 : i32
    %c0_i32_0 = arith.constant 0 : i32
    %c0_i32_1 = arith.constant 0 : i32
    return %arg0, %c0_i32, %c0_i32_0 : i32, i32, i32
  }
}

</mosaic_0001>

<llo_original>
// kernel: tpu_custom_call.1
$region0: #{tpu_custom_call.1}
  #allocation0 [shape = 'u32[]', space=smem, size = 0x4, offset = 0x4, fixed_abs, tag = 'smem constant byte address 0x4 - core index']
  #allocation1 [shape = 'u32[72,128]{1,0:T(1,128)}', space=vmem, size = 0x9000, scoped, tag = 'internal scratch']
  #allocation2 [shape = 'f32[16,48]{1,0:T(8,128)}', space=vmem, size = 0x2000, scoped, tag = 'scratch operand']
  %s0 = inlined_call_operand.vmem [shape: f32[2,16,8], index: 0, kind: input, shape index: {}]
  %s1 = inlined_call_operand.vmem [shape: bf16[24,16], index: 1, kind: input, shape index: {}]
  %s2 = inlined_call_operand.vmem [shape: f32[1,16], index: 2, kind: input, shape index: {}]
  %s3 = inlined_call_operand.vmem [shape: bf16[48,32], index: 3, kind: input, shape index: {}]
  %s4 = inlined_call_operand.vmem [shape: f32[1,32], index: 4, kind: input, shape index: {}]
  %s5 = inlined_call_operand.hbm [shape: f32[2,16,32], index: 5, kind: output, shape index: {}]
  %s6 = sld [smem:[#allocation0]]
  $region53: #{tpu_custom_call.1} parent=0
    _
  %s8 = ssub.s32 1, %s6
  %s9 = scalar_select 0, %s8, %s6
  $region1: #{tpu_custom_call.1} parent=0
    #allocation3 [shape = 'u8[16384]{0}', space=vmem, size = 0x4000, scoped, tag = 'output window, operand 0']
    #allocation4 [shape = 's32[2]{0}', space=sflag, size = 0x8, scoped, tag = 'scoped memory for tpu_custom_call.1']
    %10 = vsyncpa [#allocation4], 0
    %s11 = scalar_lea.sflag [#allocation4], 1
    %12 = vsyncpa %s11, 0
    loop: start=0, step=1, limit=4
    $region2: #{tpu_custom_call.1} parent=1 // loop_pre_header
      _
    $region3: #{tpu_custom_call.1} parent=1 // loop_header
      %s14 = sphi 0, %s18
      %p15 = scmp.ge.s32.totalorder %s14, 4
      %s24 = sphi 0, %s26
      %s27 = sphi 0, %s24
      %s28 = sphi 0, %s27
      %s44 = sphi 0, %s28
      %s48 = sphi 0, %s48
      %s50 = sphi 0, %s48
      %s51 = sphi 0, %s50
      %s65 = sphi 0, %s51
      %s69 = sphi 0, %s69
      %s71 = sphi 0, %s69
      %s72 = sphi 0, %s71
      %s86 = sphi 0, %s72
      %s90 = sphi 0, %s90
      %s92 = sphi 0, %s90
      %s93 = sphi 0, %s92
      %s107 = sphi 0, %s93
      %s111 = sphi 0, %s111
      %s113 = sphi 0, %s111
      %s114 = sphi 0, %s113
      %s128 = sphi 0, %s114
      %s134 = sphi 0, %s136
      %s137 = sphi 0, %s134
      %s138 = sphi 0, %s137
      %s154 = sphi 0, %s138
    $region4: #{tpu_custom_call.1} parent=1 // loop_header_branch
      %17 = sbr.rel (%p15) target = $region8
    $region5: #{tpu_custom_call.1} parent=1 // loop_body
      %s19 = ssub.s32 %s14, 1
      %s20 = ssub.s32 %s14, 2
      %s21 = sadd.s32 %s14, 1
      %s22 = ssub.s32 %s14, %s21
      %p23 = scmp.eq.s32.totalorder %s22, 0
      %s25 = sadd.s32 %s24, 1
      %s26 = scalar_select %p23, %s24, %s25
      %p29 = pneg %p23
      %p30 = scmp.eq.s32.totalorder %s14, 1
      %p31 = por %p29, %p30
      %p32 = scmp.ne.s32.totalorder %s24, %s27
      %p33 = scmp.eq.s32.totalorder %s14, 0
      %p34 = por %p32, %p33
      %p35 = scmp.ne.s32.totalorder %s24, %s27
      %p36 = scmp.eq.s32.totalorder %s19, 1
      %p37 = por %p35, %p36
      %p38 = scmp.ne.s32.totalorder %s27, %s28
      %p39 = scmp.eq.s32.totalorder %s19, 0
      %p40 = por %p38, %p39
      %p41 = scmp.ne.s32.totalorder %s27, %s28
      %p42 = scmp.eq.s32.totalorder %s20, 1
      %p43 = por %p41, %p42
      %p45 = scmp.ne.s32.totalorder %s28, %s44
      %p46 = scmp.eq.s32.totalorder %s20, 0
      %p47 = por %p45, %p46
      %s49 = sadd.s32 %s48, 1
      %p52 = scmp.eq.s32.totalorder %s14, 1
      %p53 = scmp.ne.s32.totalorder %s48, %s50
      %p54 = scmp.eq.s32.totalorder %s14, 0
      %p55 = por %p53, %p54
      %p56 = scmp.ne.s32.totalorder %s48, %s50
      %p57 = scmp.eq.s32.totalorder %s19, 1
      %p58 = por %p56, %p57
      %p59 = scmp.ne.s32.totalorder %s50, %s51
      %p60 = scmp.eq.s32.totalorder %s19, 0
      %p61 = por %p59, %p60
      %p62 = scmp.ne.s32.totalorder %s50, %s51
      %p63 = scmp.eq.s32.totalorder %s20, 1
      %p64 = por %p62, %p63
      %p66 = scmp.ne.s32.totalorder %s51, %s65
      %p67 = scmp.eq.s32.totalorder %s20, 0
      %p68 = por %p66, %p67
      %s70 = sadd.s32 %s69, 1
      %p73 = scmp.eq.s32.totalorder %s14, 1
      %p74 = scmp.ne.s32.totalorder %s69, %s71
      %p75 = scmp.eq.s32.totalorder %s14, 0
      %p76 = por %p74, %p75
      %p77 = scmp.ne.s32.totalorder %s69, %s71
      %p78 = scmp.eq.s32.totalorder %s19, 1
      %p79 = por %p77, %p78
      %p80 = scmp.ne.s32.totalorder %s71, %s72
      %p81 = scmp.eq.s32.totalorder %s19, 0
      %p82 = por %p80, %p81
      %p83 = scmp.ne.s32.totalorder %s71, %s72
      %p84 = scmp.eq.s32.totalorder %s20, 1
      %p85 = por %p83, %p84
      %p87 = scmp.ne.s32.totalorder %s72, %s86
      %p88 = scmp.eq.s32.totalorder %s20, 0
      %p89 = por %p87, %p88
      %s91 = sadd.s32 %s90, 1
      %p94 = scmp.eq.s32.totalorder %s14, 1
      %p95 = scmp.ne.s32.totalorder %s90, %s92
      %p96 = scmp.eq.s32.totalorder %s14, 0
      %p97 = por %p95, %p96
      %p98 = scmp.ne.s32.totalorder %s90, %s92
      %p99 = scmp.eq.s32.totalorder %s19, 1
      %p100 = por %p98, %p99
      %p101 = scmp.ne.s32.totalorder %s92, %s93
      %p102 = scmp.eq.s32.totalorder %s19, 0
      %p103 = por %p101, %p102
      %p104 = scmp.ne.s32.totalorder %s92, %s93
      %p105 = scmp.eq.s32.totalorder %s20, 1
      %p106 = por %p104, %p105
      %p108 = scmp.ne.s32.totalorder %s93, %s107
      %p109 = scmp.eq.s32.totalorder %s20, 0
      %p110 = por %p108, %p109
      %s112 = sadd.s32 %s111, 1
      %p115 = scmp.eq.s32.totalorder %s14, 1
      %p116 = scmp.ne.s32.totalorder %s111, %s113
      %p117 = scmp.eq.s32.totalorder %s14, 0
      %p118 = por %p116, %p117
      %p119 = scmp.ne.s32.totalorder %s111, %s113
      %p120 = scmp.eq.s32.totalorder %s19, 1
      %p121 = por %p119, %p120
      %p122 = scmp.ne.s32.totalorder %s113, %s114
      %p123 = scmp.eq.s32.totalorder %s19, 0
      %p124 = por %p122, %p123
      %p125 = scmp.ne.s32.totalorder %s113, %s114
      %p126 = scmp.eq.s32.totalorder %s20, 1
      %p127 = por %p125, %p126
      %p129 = scmp.ne.s32.totalorder %s114, %s128
      %p130 = scmp.eq.s32.totalorder %s20, 0
      %p131 = por %p129, %p130
      %s132 = ssub.s32 %s14, %s21
      %p133 = scmp.eq.s32.totalorder %s132, 0
      %s135 = sadd.s32 %s134, 1
      %s136 = scalar_select %p133, %s134, %s135
      %p139 = pneg %p133
      %p140 = scmp.eq.s32.totalorder %s14, 1
      %p141 = por %p139, %p140
      %p142 = scmp.ne.s32.totalorder %s134, %s137
      %p143 = scmp.eq.s32.totalorder %s14, 0
      %p144 = por %p142, %p143
      %p145 = scmp.ne.s32.totalorder %s134, %s137
      %p146 = scmp.eq.s32.totalorder %s19, 1
      %p147 = por %p145, %p146
      %p148 = scmp.ne.s32.totalorder %s137, %s138
      %p149 = scmp.eq.s32.totalorder %s19, 0
      %p150 = por %p148, %p149
      %p151 = scmp.ne.s32.totalorder %s137, %s138
      %p152 = scmp.eq.s32.totalorder %s20, 1
      %p153 = por %p151, %p152
      %p155 = scmp.ne.s32.totalorder %s138, %s154
      %p156 = scmp.eq.s32.totalorder %s20, 0
      %p157 = por %p155, %p156
      %p158 = scmp.le.s32.totalorder 1, %s14
      %p159 = scmp.lt.s32.totalorder %s14, 3
      %p160 = pnand %p158, %p159
      %p161 = pneg %p160
      // Predicated region
      $region9: #{tpu_custom_call.1} parent=5 // pred_check
        _
      $region10: #{tpu_custom_call.1} parent=5 // pred_check_branch
        %163 = sbr.rel (%p160) target = $region12
      $region11: #{tpu_custom_call.1} parent=5 // pred_region
        %s164 = ssub.s32 %s14, 1
        // Predicated region
        $region13: #{tpu_custom_call.1} parent=11 // pred_check
          %p165 = pneg %p61
        $region14: #{tpu_custom_call.1} parent=11 // pred_check_branch
          %167 = sbr.rel (%p165) target = $region16
        $region15: #{tpu_custom_call.1} parent=11 // pred_region
          _
        $region16: #{tpu_custom_call.1} parent=11 // pred_fallthru
          _
        // Predicated region
        $region17: #{tpu_custom_call.1} parent=11 // pred_check
          %p168 = pneg %p82
        $region18: #{tpu_custom_call.1} parent=11 // pred_check_branch
          %170 = sbr.rel (%p168) target = $region20
        $region19: #{tpu_custom_call.1} parent=11 // pred_region
          _
        $region20: #{tpu_custom_call.1} parent=11 // pred_fallthru
          _
        // Predicated region
        $region21: #{tpu_custom_call.1} parent=11 // pred_check
          %p171 = pneg %p103
        $region22: #{tpu_custom_call.1} parent=11 // pred_check_branch
          %173 = sbr.rel (%p171) target = $region24
        $region23: #{tpu_custom_call.1} parent=11 // pred_region
          _
        $region24: #{tpu_custom_call.1} parent=11 // pred_fallthru
          _
        // Predicated region
        $region25: #{tpu_custom_call.1} parent=11 // pred_check
          %p174 = pneg %p124
        $region26: #{tpu_custom_call.1} parent=11 // pred_check_branch
          %176 = sbr.rel (%p174) target = $region28
        $region27: #{tpu_custom_call.1} parent=11 // pred_region
          _
        $region28: #{tpu_custom_call.1} parent=11 // pred_fallthru
          _
      $region12: #{tpu_custom_call.1} parent=5 // pred_fallthru
        _
      %p177 = scmp.lt.s32.totalorder %s14, 2
      // Predicated region
      $region29: #{tpu_custom_call.1} parent=5 // pred_check
        %p178 = pneg %p177
      $region30: #{tpu_custom_call.1} parent=5 // pred_check_branch
        %180 = sbr.rel (%p178) target = $region32
      $region31: #{tpu_custom_call.1} parent=5 // pred_region
        // Predicated region
        $region33: #{tpu_custom_call.1} parent=31 // pred_check
          %p181 = pneg %p34
        $region34: #{tpu_custom_call.1} parent=31 // pred_check_branch
          %183 = sbr.rel (%p181) target = $region36
        $region35: #{tpu_custom_call.1} parent=31 // pred_region
          %p184 = scmp.lt.s32.totalorder %s14, 1
          %s185 = scalar_select %p184, %s14, 1
          %s186 = smul.addr %s185, 2
          %s187 = smul.addr %s186, 8
          %s188 = scalar_lea.vmem %s0, %s187
        $region36: #{tpu_custom_call.1} parent=31 // pred_fallthru
          _
      $region32: #{tpu_custom_call.1} parent=5 // pred_fallthru
        _
      %p189 = scmp.le.s32.totalorder 1, %s14
      %p190 = scmp.lt.s32.totalorder %s14, 3
      %p191 = pnand %p189, %p190
      %p192 = pneg %p191
      // Predicated region
      $region37: #{tpu_custom_call.1} parent=5 // pred_check
        _
      $region38: #{tpu_custom_call.1} parent=5 // pred_check_branch
        %194 = sbr.rel (%p191) target = $region40
      $region39: #{tpu_custom_call.1} parent=5 // pred_region
        %s195 = ssub.s32 %s14, 1
        %p196 = scmp.lt.s32.totalorder %s19, 1
        %s197 = scalar_select %p196, %s19, 1
        %s198 = smul.addr %s197, 2
        %s199 = smul.addr %s198, 8
        %s200 = scalar_lea.vmem %s0, %s199
        %p201 = pneg %p40
        %p202 = pneg %p37
        %p203 = pneg %p61
        %p204 = pneg %p58
        %p205 = pneg %p82
        %p206 = pneg %p79
        %p207 = pneg %p103
        %p208 = pneg %p100
        %p209 = pneg %p124
        %p210 = pneg %p121
        %p211 = pneg %p150
        %p212 = pneg %p147
        %s213 = sand.u32 %s137, 1
        %s214 = scalar_lea.sflag [#allocation4], %s213
        %s215 = sand.u32 %s137, 1
        %s216 = smul.addr %s215, 16
        %s217 = scalar_lea.vmem [#allocation3], %s216
        %p218 = scmp.lt.s32.totalorder %s19, 1
        %s219 = scalar_select %p218, %s19, 1
        %s220 = smul.addr %s219, 2
        %s221 = smul.addr %s220, 8
        %s222 = scalar_lea.vmem %s0, %s221
        %v224 = vld [vmem:[%s222] sm:$0xff]
        %v225 = vld [vmem:[%s222 + $0x8] sm:$0xff]
        %vm226 = vcmask 189440
        %227 = vst.msk [vmem:[#allocation2] sm:$0x3] %vm226, 0.0
        %vm228 = vcmask 64512
        %229 = vst.msk [vmem:[#allocation2 + $0x2] sm:$0xff] %vm228, %v224
        %vm230 = vcmask 62464
        %231 = vst.msk [vmem:[#allocation2 + $0xa] sm:$0x3f] %vm230, %v225
        %234 = vrot.lane.b32.xlu0 %v224, 8
        %v235 = vpop.permute.xlu0 %234
        %236 = vrot.lane.b32.xlu0 %v225, 8
        %v237 = vpop.permute.xlu0 %236
        %vm240 = vcmask 130112
        %241 = vst.msk [vmem:[#allocation2 + $0x1] sm:$0xff] %vm240, %v235
        %vm242 = vcmask 129088
        %243 = vst.msk [vmem:[#allocation2 + $0x9] sm:$0x7f] %vm242, %v237
        %244 = vrot.lane.b32.xlu0 %v224, 16
        %v245 = vpop.permute.xlu0 %244
        %246 = vrot.lane.b32.xlu0 %v225, 16
        %v247 = vpop.permute.xlu0 %246
        %vm250 = vcmask 195712
        %251 = vst.msk [vmem:[#allocation2] sm:$0xff] %vm250, %v245
        %252 = vst.msk [vmem:[#allocation2 + $0x8] sm:$0xff] %vm250, %v247
        %v253 = vld [vmem:[#allocation2] sm:$0xff]
        %v254 = vld [vmem:[#allocation2 + $0x8] sm:$0xff]
        %v255 = vpack.c.bf16 %v254, %v253
        %v256 = vld [vmem:[%s1] sm:$0xf]
        %v257 = vld [vmem:[%s1 + $0x4] sm:$0xf]
        %v258 = vld [vmem:[%s1 + $0x8] sm:$0xf]
        %v259 = vld [vmem:[%s2] sm:$0x1]
        %v261 = vperm.slane %v259, 0
        %v266 = vunpack.c.l.b16 %v256
        %v267 = vunpack.c.l.b16 %v257
        %v268 = vunpack.c.l.b16 %v258
        %v269 = vpack.c.b16 %v267, %v266
        %v270 = vpack.c.b16 %v268, %v268
        %vm272 = vcmask 195584
        %v274 = vsel %vm272, %v255, 0
        %vm276 = vcmask 1043456
        %v278 = vsel %vm276, %v270, 0
        %280 = vmatpush.bf16.msra.mxu0 0
        %281 = vmatpush.bf16.msra.mxu0 0
        %282 = vmatpush.bf16.msra.mxu0 0
        %283 = vmatpush.bf16.msra.mxu0 0
        %284 = vmatpush.bf16.msra.mxu0 0
        %285 = vmatpush.bf16.msra.mxu0 0
        %286 = vmatpush.bf16.msra.mxu0 %v278
        %287 = vmatpush.bf16.msra.mxu0 %v269
        %288 = vmatmul.bf16.gmra.mxu0 %v274
        %v289 = vpop.f32.mrf.mxu0
        %v290 = vadd.f32 %v261, %v289
        %v291 = vpop.f32.mrf.mxu0
        %v292 = vadd.f32 %v261, %v291
        %293 = vdwg.mxu0
        %v294 = vmax.f32 %v290, 0.0
        %v295 = vmax.f32 %v292, 0.0
        %vm296 = vcmask 388096
        %297 = vst.msk [vmem:[#allocation2] sm:$0xf] %vm296, 0.0
        %vm298 = vcmask 130048
        %299 = vst.msk [vmem:[#allocation2 + $0x4] sm:$0xff] %vm298, %v294
        %vm300 = vcmask 125952
        %301 = vst.msk [vmem:[#allocation2 + $0xc] sm:$0xf] %vm300, %v295
        %304 = vrot.lane.b32.xlu0 %v294, 16
        %v305 = vpop.permute.xlu0 %304
        %306 = vrot.lane.b32.xlu0 %v295, 16
        %v307 = vpop.permute.xlu0 %306
        %vm310 = vcmask 261248
        %311 = vst.msk [vmem:[#allocation2 + $0x2] sm:$0xff] %vm310, %v305
        %vm312 = vcmask 259200
        %313 = vst.msk [vmem:[#allocation2 + $0xa] sm:$0x3f] %vm312, %v307
        %314 = vrot.lane.b32.xlu0 %v294, 32
        %v315 = vpop.permute.xlu0 %314
        %316 = vrot.lane.b32.xlu0 %v295, 32
        %v317 = vpop.permute.xlu0 %316
        %vm320 = vcmask 392448
        %321 = vst.msk [vmem:[#allocation2] sm:$0xff] %vm320, %v315
        %322 = vst.msk [vmem:[#allocation2 + $0x8] sm:$0xff] %vm320, %v317
        %v323 = vld [vmem:[#allocation2] sm:$0xff]
        %v324 = vld [vmem:[#allocation2 + $0x8] sm:$0xff]
        %v325 = vpack.c.bf16 %v324, %v323
        %v326 = vld [vmem:[%s3] sm:$0xf]
        %v327 = vld [vmem:[%s3 + $0x4] sm:$0xf]
        %v328 = vld [vmem:[%s3 + $0x8] sm:$0xf]
        %v329 = vld [vmem:[%s3 + $0xc] sm:$0xf]
        %v330 = vld [vmem:[%s3 + $0x10] sm:$0xf]
        %v331 = vld [vmem:[%s3 + $0x14] sm:$0xf]
        %v332 = vld [vmem:[%s4] sm:$0x1]
        %v334 = vperm.slane %v332, 0
        %v342 = vunpack.c.l.b16 %v326
        %v343 = vunpack.c.l.b16 %v327
        %v344 = vunpack.c.l.b16 %v328
        %v345 = vunpack.c.l.b16 %v329
        %v346 = vunpack.c.l.b16 %v330
        %v347 = vunpack.c.l.b16 %v331
        %v348 = vpack.c.b16 %v343, %v342
        %v349 = vpack.c.b16 %v345, %v344
        %v350 = vpack.c.b16 %v347, %v346
        %vm354 = vcmask 392192
        %v356 = vsel %vm354, %v325, 0
        %358 = vmatpush.bf16.msra.mxu0 0
        %359 = vmatpush.bf16.msra.mxu0 0
        %360 = vmatpush.bf16.msra.mxu0 0
        %361 = vmatpush.bf16.msra.mxu0 0
        %362 = vmatpush.bf16.msra.mxu0 0
        %363 = vmatpush.bf16.msra.mxu0 %v350
        %364 = vmatpush.bf16.msra.mxu0 %v349
        %365 = vmatpush.bf16.msra.mxu0 %v348
        %366 = vmatmul.bf16.gmra.mxu0 %v356
        %v367 = vpop.f32.mrf.mxu0
        %v368 = vadd.f32 %v334, %v367
        %v369 = vpop.f32.mrf.mxu0
        %v370 = vadd.f32 %v334, %v369
        %371 = vdwg.mxu0
        %v372 = vmax.f32 %v368, 0.0
        %v373 = vmax.f32 %v370, 0.0
        %vm374 = vcmask 261120
        %375 = vst.msk [vmem:[%s217] sm:$0xff] %vm374, %v372
        %376 = vst.msk [vmem:[%s217 + $0x8] sm:$0xff] %vm374, %v373
        %s377 = sand.u32 %s137, 1
        %s378 = scalar_lea.sflag [#allocation4], %s377
        %s379 = sand.u32 %s137, 1
        %s380 = smul.addr %s379, 16
        %s381 = scalar_lea.vmem [#allocation3], %s380
        // Predicated region
        $region41: #{tpu_custom_call.1} parent=39 // pred_check
          %p382 = pneg %p147
        $region42: #{tpu_custom_call.1} parent=39 // pred_check_branch
          %384 = sbr.rel (%p382) target = $region44
        $region43: #{tpu_custom_call.1} parent=39 // pred_region
          %386 = vsyncadd %s378, 0
          %s387 = smul.addr %s19, 2
          %s388 = smul.addr %s387, 8
          %s389 = scalar_lea.hbm %s5, %s388
          %s390 = sshll.u32 %s381, 4
          %s391 = int_to_ptr.vmem [resolvable:$true] %s390
          %s392 = sshll.u32 %s389, 4
          %s393 = int_to_ptr.hbm [resolvable:$true] %s392
          %398 = dma.vmem_to_hbm [thread:$0]  %s391, 256, %s393, %s378, 128, 128, 8
        $region44: #{tpu_custom_call.1} parent=39 // pred_fallthru
          _
      $region40: #{tpu_custom_call.1} parent=5 // pred_fallthru
        _
      %p399 = scmp.le.s32.totalorder 2, %s14
      // Predicated region
      $region45: #{tpu_custom_call.1} parent=5 // pred_check
        %p400 = pneg %p399
      $region46: #{tpu_custom_call.1} parent=5 // pred_check_branch
        %402 = sbr.rel (%p400) target = $region48
      $region47: #{tpu_custom_call.1} parent=5 // pred_region
        %s403 = ssub.s32 %s14, 2
        // Predicated region
        $region49: #{tpu_custom_call.1} parent=47 // pred_check
          %p404 = pneg %p153
        $region50: #{tpu_custom_call.1} parent=47 // pred_check_branch
          %406 = sbr.rel (%p404) target = $region52
        $region51: #{tpu_custom_call.1} parent=47 // pred_region
          %s407 = sand.u32 %s138, 1
          %s408 = scalar_lea.sflag [#allocation4], %s407
          %s409 = sand.u32 %s138, 1
          %s410 = smul.addr %s409, 16
          %s411 = scalar_lea.vmem [#allocation3], %s410
          %413 = dma.done %s408, 256
        $region52: #{tpu_custom_call.1} parent=47 // pred_fallthru
          _
      $region48: #{tpu_custom_call.1} parent=5 // pred_fallthru
        _
    $region6: #{tpu_custom_call.1} parent=1 // loop_footer
      %s18 = sadd.s32 1, %s14
    $region7: #{tpu_custom_call.1} parent=1 // loop_footer_branch
      %13 = sbr.rel target = $region3
    $region8: #{tpu_custom_call.1} parent=1 // loop_exit
      _
    %414 = vsyncpa [#allocation4], 1
    %s415 = scalar_lea.sflag [#allocation4], 1
    %416 = vsyncpa %s415, 1

// kernel: tpu_custom_call.1
$region0: #{tpu_custom_call.1}
  #allocation0 [shape = 'u32[]', space=smem, size = 0x4, offset = 0x4, fixed_abs, tag = 'smem constant byte address 0x4 - core index']
  #allocation1 [shape = 'u32[72,128]{1,0:T(1,128)}', space=vmem, size = 0x9000, scoped, tag = 'internal scratch']
  #allocation2 [shape = 'f32[16,48]{1,0:T(8,128)}', space=vmem, size = 0x2000, scoped, tag = 'scratch operand']
  %s0 = inlined_call_operand.vmem [shape: f32[2,16,8], index: 0, kind: input, shape index: {}]
  %s1 = inlined_call_operand.vmem [shape: bf16[24,16], index: 1, kind: input, shape index: {}]
  %s2 = inlined_call_operand.vmem [shape: f32[1,16], index: 2, kind: input, shape index: {}]
  %s3 = inlined_call_operand.vmem [shape: bf16[48,32], index: 3, kind: input, shape index: {}]
  %s4 = inlined_call_operand.vmem [shape: f32[1,32], index: 4, kind: input, shape index: {}]
  %s5 = inlined_call_operand.hbm [shape: f32[2,16,32], index: 5, kind: output, shape index: {}]
  %s6 = sld [smem:[#allocation0]]
  $region53: #{tpu_custom_call.1} parent=0
    _
  %s8 = ssub.s32 1, %s6
  %s9 = scalar_select 0, %s8, %s6
  $region1: #{tpu_custom_call.1} parent=0
    #allocation3 [shape = 'u8[16384]{0}', space=vmem, size = 0x4000, scoped, tag = 'output window, operand 0']
    #allocation4 [shape = 's32[2]{0}', space=sflag, size = 0x8, scoped, tag = 'scoped memory for tpu_custom_call.1']
    %10 = vsyncpa [#allocation4], 0
    %s11 = scalar_lea.sflag [#allocation4], 1
    %12 = vsyncpa %s11, 0
    loop: start=0, step=1, limit=4
    $region2: #{tpu_custom_call.1} parent=1 // loop_pre_header
      _
    $region3: #{tpu_custom_call.1} parent=1 // loop_header
      %s14 = sphi 0, %s18
      %p15 = scmp.ge.s32.totalorder %s14, 4
      %s24 = sphi 0, %s26
      %s27 = sphi 0, %s24
      %s28 = sphi 0, %s27
      %s44 = sphi 0, %s28
      %s48 = sphi 0, %s48
      %s50 = sphi 0, %s48
      %s51 = sphi 0, %s50
      %s65 = sphi 0, %s51
      %s69 = sphi 0, %s69
      %s71 = sphi 0, %s69
      %s72 = sphi 0, %s71
      %s86 = sphi 0, %s72
      %s90 = sphi 0, %s90
      %s92 = sphi 0, %s90
      %s93 = sphi 0, %s92
      %s107 = sphi 0, %s93
      %s111 = sphi 0, %s111
      %s113 = sphi 0, %s111
      %s114 = sphi 0, %s113
      %s128 = sphi 0, %s114
      %s134 = sphi 0, %s136
      %s137 = sphi 0, %s134
      %s138 = sphi 0, %s137
      %s154 = sphi 0, %s138
    $region4: #{tpu_custom_call.1} parent=1 // loop_header_branch
      %17 = sbr.rel (%p15) target = $region8
    $region5: #{tpu_custom_call.1} parent=1 // loop_body
      %s19 = ssub.s32 %s14, 1
      %s20 = ssub.s32 %s14, 2
      %s21 = sadd.s32 %s14, 1
      %s22 = ssub.s32 %s14, %s21
      %p23 = scmp.eq.s32.totalorder %s22, 0
      %s25 = sadd.s32 %s24, 1
      %s26 = scalar_select %p23, %s24, %s25
      %p29 = pneg %p23
      %p30 = scmp.eq.s32.totalorder %s14, 1
      %p31 = por %p29, %p30
      %p32 = scmp.ne.s32.totalorder %s24, %s27
      %p33 = scmp.eq.s32.totalorder %s14, 0
      %p34 = por %p32, %p33
      %p35 = scmp.ne.s32.totalorder %s24, %s27
      %p36 = scmp.eq.s32.totalorder %s19, 1
      %p37 = por %p35, %p36
      %p38 = scmp.ne.s32.totalorder %s27, %s28
      %p39 = scmp.eq.s32.totalorder %s19, 0
      %p40 = por %p38, %p39
      %p41 = scmp.ne.s32.totalorder %s27, %s28
      %p42 = scmp.eq.s32.totalorder %s20, 1
      %p43 = por %p41, %p42
      %p45 = scmp.ne.s32.totalorder %s28, %s44
      %p46 = scmp.eq.s32.totalorder %s20, 0
      %p47 = por %p45, %p46
      %s49 = sadd.s32 %s48, 1
      %p52 = scmp.eq.s32.totalorder %s14, 1
      %p53 = scmp.ne.s32.totalorder %s48, %s50
      %p54 = scmp.eq.s32.totalorder %s14, 0
      %p55 = por %p53, %p54
      %p56 = scmp.ne.s32.totalorder %s48, %s50
      %p57 = scmp.eq.s32.totalorder %s19, 1
      %p58 = por %p56, %p57
      %p59 = scmp.ne.s32.totalorder %s50, %s51
      %p60 = scmp.eq.s32.totalorder %s19, 0
      %p61 = por %p59, %p60
      %p62 = scmp.ne.s32.totalorder %s50, %s51
      %p63 = scmp.eq.s32.totalorder %s20, 1
      %p64 = por %p62, %p63
      %p66 = scmp.ne.s32.totalorder %s51, %s65
      %p67 = scmp.eq.s32.totalorder %s20, 0
      %p68 = por %p66, %p67
      %s70 = sadd.s32 %s69, 1
      %p73 = scmp.eq.s32.totalorder %s14, 1
      %p74 = scmp.ne.s32.totalorder %s69, %s71
      %p75 = scmp.eq.s32.totalorder %s14, 0
      %p76 = por %p74, %p75
      %p77 = scmp.ne.s32.totalorder %s69, %s71
      %p78 = scmp.eq.s32.totalorder %s19, 1
      %p79 = por %p77, %p78
      %p80 = scmp.ne.s32.totalorder %s71, %s72
      %p81 = scmp.eq.s32.totalorder %s19, 0
      %p82 = por %p80, %p81
      %p83 = scmp.ne.s32.totalorder %s71, %s72
      %p84 = scmp.eq.s32.totalorder %s20, 1
      %p85 = por %p83, %p84
      %p87 = scmp.ne.s32.totalorder %s72, %s86
      %p88 = scmp.eq.s32.totalorder %s20, 0
      %p89 = por %p87, %p88
      %s91 = sadd.s32 %s90, 1
      %p94 = scmp.eq.s32.totalorder %s14, 1
      %p95 = scmp.ne.s32.totalorder %s90, %s92
      %p96 = scmp.eq.s32.totalorder %s14, 0
      %p97 = por %p95, %p96
      %p98 = scmp.ne.s32.totalorder %s90, %s92
      %p99 = scmp.eq.s32.totalorder %s19, 1
      %p100 = por %p98, %p99
      %p101 = scmp.ne.s32.totalorder %s92, %s93
      %p102 = scmp.eq.s32.totalorder %s19, 0
      %p103 = por %p101, %p102
      %p104 = scmp.ne.s32.totalorder %s92, %s93
      %p105 = scmp.eq.s32.totalorder %s20, 1
      %p106 = por %p104, %p105
      %p108 = scmp.ne.s32.totalorder %s93, %s107
      %p109 = scmp.eq.s32.totalorder %s20, 0
      %p110 = por %p108, %p109
      %s112 = sadd.s32 %s111, 1
      %p115 = scmp.eq.s32.totalorder %s14, 1
      %p116 = scmp.ne.s32.totalorder %s111, %s113
      %p117 = scmp.eq.s32.totalorder %s14, 0
      %p118 = por %p116, %p117
      %p119 = scmp.ne.s32.totalorder %s111, %s113
      %p120 = scmp.eq.s32.totalorder %s19, 1
      %p121 = por %p119, %p120
      %p122 = scmp.ne.s32.totalorder %s113, %s114
      %p123 = scmp.eq.s32.totalorder %s19, 0
      %p124 = por %p122, %p123
      %p125 = scmp.ne.s32.totalorder %s113, %s114
      %p126 = scmp.eq.s32.totalorder %s20, 1
      %p127 = por %p125, %p126
      %p129 = scmp.ne.s32.totalorder %s114, %s128
      %p130 = scmp.eq.s32.totalorder %s20, 0
      %p131 = por %p129, %p130
      %s132 = ssub.s32 %s14, %s21
      %p133 = scmp.eq.s32.totalorder %s132, 0
      %s135 = sadd.s32 %s134, 1
      %s136 = scalar_select %p133, %s134, %s135
      %p139 = pneg %p133
      %p140 = scmp.eq.s32.totalorder %s14, 1
      %p141 = por %p139, %p140
      %p142 = scmp.ne.s32.totalorder %s134, %s137
      %p143 = scmp.eq.s32.totalorder %s14, 0
      %p144 = por %p142, %p143
      %p145 = scmp.ne.s32.totalorder %s134, %s137
      %p146 = scmp.eq.s32.totalorder %s19, 1
      %p147 = por %p145, %p146
      %p148 = scmp.ne.s32.totalorder %s137, %s138
      %p149 = scmp.eq.s32.totalorder %s19, 0
      %p150 = por %p148, %p149
      %p151 = scmp.ne.s32.totalorder %s137, %s138
      %p152 = scmp.eq.s32.totalorder %s20, 1
      %p153 = por %p151, %p152
      %p155 = scmp.ne.s32.totalorder %s138, %s154
      %p156 = scmp.eq.s32.totalorder %s20, 0
      %p157 = por %p155, %p156
      %p158 = scmp.le.s32.totalorder 1, %s14
      %p159 = scmp.lt.s32.totalorder %s14, 3
      %p160 = pnand %p158, %p159
      %p161 = pneg %p160
      // Predicated region
      $region9: #{tpu_custom_call.1} parent=5 // pred_check
        _
      $region10: #{tpu_custom_call.1} parent=5 // pred_check_branch
        %163 = sbr.rel (%p160) target = $region12
      $region11: #{tpu_custom_call.1} parent=5 // pred_region
        %s164 = ssub.s32 %s14, 1
        // Predicated region
        $region13: #{tpu_custom_call.1} parent=11 // pred_check
          %p165 = pneg %p61
        $region14: #{tpu_custom_call.1} parent=11 // pred_check_branch
          %167 = sbr.rel (%p165) target = $region16
        $region15: #{tpu_custom_call.1} parent=11 // pred_region
          _
        $region16: #{tpu_custom_call.1} parent=11 // pred_fallthru
          _
        // Predicated region
        $region17: #{tpu_custom_call.1} parent=11 // pred_check
          %p168 = pneg %p82
        $region18: #{tpu_custom_call.1} parent=11 // pred_check_branch
          %170 = sbr.rel (%p168) target = $region20
        $region19: #{tpu_custom_call.1} parent=11 // pred_region
          _
        $region20: #{tpu_custom_call.1} parent=11 // pred_fallthru
          _
        // Predicated region
        $region21: #{tpu_custom_call.1} parent=11 // pred_check
          %p171 = pneg %p103
        $region22: #{tpu_custom_call.1} parent=11 // pred_check_branch
          %173 = sbr.rel (%p171) target = $region24
        $region23: #{tpu_custom_call.1} parent=11 // pred_region
          _
        $region24: #{tpu_custom_call.1} parent=11 // pred_fallthru
          _
        // Predicated region
        $region25: #{tpu_custom_call.1} parent=11 // pred_check
          %p174 = pneg %p124
        $region26: #{tpu_custom_call.1} parent=11 // pred_check_branch
          %176 = sbr.rel (%p174) target = $region28
        $region27: #{tpu_custom_call.1} parent=11 // pred_region
          _
        $region28: #{tpu_custom_call.1} parent=11 // pred_fallthru
          _
      $region12: #{tpu_custom_call.1} parent=5 // pred_fallthru
        _
      %p177 = scmp.lt.s32.totalorder %s14, 2
      // Predicated region
      $region29: #{tpu_custom_call.1} parent=5 // pred_check
        %p178 = pneg %p177
      $region30: #{tpu_custom_call.1} parent=5 // pred_check_branch
        %180 = sbr.rel (%p178) target = $region32
      $region31: #{tpu_custom_call.1} parent=5 // pred_region
        // Predicated region
        $region33: #{tpu_custom_call.1} parent=31 // pred_check
          %p181 = pneg %p34
        $region34: #{tpu_custom_call.1} parent=31 // pred_check_branch
          %183 = sbr.rel (%p181) target = $region36
        $region35: #{tpu_custom_call.1} parent=31 // pred_region
          %p184 = scmp.lt.s32.totalorder %s14, 1
          %s185 = scalar_select %p184, %s14, 1
          %s186 = smul.addr %s185, 2
          %s187 = smul.addr %s186, 8
          %s188 = scalar_lea.vmem %s0, %s187
        $region36: #{tpu_custom_call.1} parent=31 // pred_fallthru
          _
      $region32: #{tpu_custom_call.1} parent=5 // pred_fallthru
        _
      %p189 = scmp.le.s32.totalorder 1, %s14
      %p190 = scmp.lt.s32.totalorder %s14, 3
      %p191 = pnand %p189, %p190
      %p192 = pneg %p191
      // Predicated region
      $region37: #{tpu_custom_call.1} parent=5 // pred_check
        _
      $region38: #{tpu_custom_call.1} parent=5 // pred_check_branch
        %194 = sbr.rel (%p191) target = $region40
      $region39: #{tpu_custom_call.1} parent=5 // pred_region
        %s195 = ssub.s32 %s14, 1
        %p196 = scmp.lt.s32.totalorder %s19, 1
        %s197 = scalar_select %p196, %s19, 1
        %s198 = smul.addr %s197, 2
        %s199 = smul.addr %s198, 8
        %s200 = scalar_lea.vmem %s0, %s199
        %p201 = pneg %p40
        %p202 = pneg %p37
        %p203 = pneg %p61
        %p204 = pneg %p58
        %p205 = pneg %p82
        %p206 = pneg %p79
        %p207 = pneg %p103
        %p208 = pneg %p100
        %p209 = pneg %p124
        %p210 = pneg %p121
        %p211 = pneg %p150
        %p212 = pneg %p147
        %s213 = sand.u32 %s137, 1
        %s214 = scalar_lea.sflag [#allocation4], %s213
        %s215 = sand.u32 %s137, 1
        %s216 = smul.addr %s215, 16
        %s217 = scalar_lea.vmem [#allocation3], %s216
        %p218 = scmp.lt.s32.totalorder %s19, 1
        %s219 = scalar_select %p218, %s19, 1
        %s220 = smul.addr %s219, 2
        %s221 = smul.addr %s220, 8
        %s222 = scalar_lea.vmem %s0, %s221
        %v224 = vld [vmem:[%s222] sm:$0xff]
        %v225 = vld [vmem:[%s222 + $0x8] sm:$0xff]
        %vm226 = vcmask 189440
        %227 = vst.msk [vmem:[#allocation2] sm:$0x3] %vm226, 0.0
        %vm228 = vcmask 64512
        %229 = vst.msk [vmem:[#allocation2 + $0x2] sm:$0xff] %vm228, %v224
        %vm230 = vcmask 62464
        %231 = vst.msk [vmem:[#allocation2 + $0xa] sm:$0x3f] %vm230, %v225
        %234 = vrot.lane.b32.xlu0 %v224, 8
        %v235 = vpop.permute.xlu0 %234
        %236 = vrot.lane.b32.xlu0 %v225, 8
        %v237 = vpop.permute.xlu0 %236
        %vm240 = vcmask 130112
        %241 = vst.msk [vmem:[#allocation2 + $0x1] sm:$0xff] %vm240, %v235
        %vm242 = vcmask 129088
        %243 = vst.msk [vmem:[#allocation2 + $0x9] sm:$0x7f] %vm242, %v237
        %244 = vrot.lane.b32.xlu0 %v224, 16
        %v245 = vpop.permute.xlu0 %244
        %246 = vrot.lane.b32.xlu0 %v225, 16
        %v247 = vpop.permute.xlu0 %246
        %vm250 = vcmask 195712
        %251 = vst.msk [vmem:[#allocation2] sm:$0xff] %vm250, %v245
        %252 = vst.msk [vmem:[#allocation2 + $0x8] sm:$0xff] %vm250, %v247
        %v253 = vld [vmem:[#allocation2] sm:$0xff]
        %v254 = vld [vmem:[#allocation2 + $0x8] sm:$0xff]
        %v255 = vpack.c.bf16 %v254, %v253
        %v256 = vld [vmem:[%s1] sm:$0xf]
        %v257 = vld [vmem:[%s1 + $0x4] sm:$0xf]
        %v258 = vld [vmem:[%s1 + $0x8] sm:$0xf]
        %v259 = vld [vmem:[%s2] sm:$0x1]
        %v261 = vperm.slane %v259, 0
        %v266 = vunpack.c.l.b16 %v256
        %v267 = vunpack.c.l.b16 %v257
        %v268 = vunpack.c.l.b16 %v258
        %v269 = vpack.c.b16 %v267, %v266
        %v270 = vpack.c.b16 %v268, %v268
        %vm272 = vcmask 195584
        %v274 = vsel %vm272, %v255, 0
        %vm276 = vcmask 1043456
        %v278 = vsel %vm276, %v270, 0
        %280 = vmatpush.bf16.msra.mxu0 0
        %281 = vmatpush.bf16.msra.mxu0 0
        %282 = vmatpush.bf16.msra.mxu0 0
        %283 = vmatpush.bf16.msra.mxu0 0
        %284 = vmatpush.bf16.msra.mxu0 0
        %285 = vmatpush.bf16.msra.mxu0 0
        %286 = vmatpush.bf16.msra.mxu0 %v278
        %287 = vmatpush.bf16.msra.mxu0 %v269
        %288 = vmatmul.bf16.gmra.mxu0 %v274
        %v289 = vpop.f32.mrf.mxu0
        %v290 = vadd.f32 %v261, %v289
        %v291 = vpop.f32.mrf.mxu0
        %v292 = vadd.f32 %v261, %v291
        %293 = vdwg.mxu0
        %v294 = vmax.f32 %v290, 0.0
        %v295 = vmax.f32 %v292, 0.0
        %vm296 = vcmask 388096
        %297 = vst.msk [vmem:[#allocation2] sm:$0xf] %vm296, 0.0
        %vm298 = vcmask 130048
        %299 = vst.msk [vmem:[#allocation2 + $0x4] sm:$0xff] %vm298, %v294
        %vm300 = vcmask 125952
        %301 = vst.msk [vmem:[#allocation2 + $0xc] sm:$0xf] %vm300, %v295
        %304 = vrot.lane.b32.xlu0 %v294, 16
        %v305 = vpop.permute.xlu0 %304
        %306 = vrot.lane.b32.xlu0 %v295, 16
        %v307 = vpop.permute.xlu0 %306
        %vm310 = vcmask 261248
        %311 = vst.msk [vmem:[#allocation2 + $0x2] sm:$0xff] %vm310, %v305
        %vm312 = vcmask 259200
        %313 = vst.msk [vmem:[#allocation2 + $0xa] sm:$0x3f] %vm312, %v307
        %314 = vrot.lane.b32.xlu0 %v294, 32
        %v315 = vpop.permute.xlu0 %314
        %316 = vrot.lane.b32.xlu0 %v295, 32
        %v317 = vpop.permute.xlu0 %316
        %vm320 = vcmask 392448
        %321 = vst.msk [vmem:[#allocation2] sm:$0xff] %vm320, %v315
        %322 = vst.msk [vmem:[#allocation2 + $0x8] sm:$0xff] %vm320, %v317
        %v323 = vld [vmem:[#allocation2] sm:$0xff]
        %v324 = vld [vmem:[#allocation2 + $0x8] sm:$0xff]
        %v325 = vpack.c.bf16 %v324, %v323
        %v326 = vld [vmem:[%s3] sm:$0xf]
        %v327 = vld [vmem:[%s3 + $0x4] sm:$0xf]
        %v328 = vld [vmem:[%s3 + $0x8] sm:$0xf]
        %v329 = vld [vmem:[%s3 + $0xc] sm:$0xf]
        %v330 = vld [vmem:[%s3 + $0x10] sm:$0xf]
        %v331 = vld [vmem:[%s3 + $0x14] sm:$0xf]
        %v332 = vld [vmem:[%s4] sm:$0x1]
        %v334 = vperm.slane %v332, 0
        %v342 = vunpack.c.l.b16 %v326
        %v343 = vunpack.c.l.b16 %v327
        %v344 = vunpack.c.l.b16 %v328
        %v345 = vunpack.c.l.b16 %v329
        %v346 = vunpack.c.l.b16 %v330
        %v347 = vunpack.c.l.b16 %v331
        %v348 = vpack.c.b16 %v343, %v342
        %v349 = vpack.c.b16 %v345, %v344
        %v350 = vpack.c.b16 %v347, %v346
        %vm354 = vcmask 392192
        %v356 = vsel %vm354, %v325, 0
        %358 = vmatpush.bf16.msra.mxu0 0
        %359 = vmatpush.bf16.msra.mxu0 0
        %360 = vmatpush.bf16.msra.mxu0 0
        %361 = vmatpush.bf16.msra.mxu0 0
        %362 = vmatpush.bf16.msra.mxu0 0
        %363 = vmatpush.bf16.msra.mxu0 %v350
        %364 = vmatpush.bf16.msra.mxu0 %v349
        %365 = vmatpush.bf16.msra.mxu0 %v348
        %366 = vmatmul.bf16.gmra.mxu0 %v356
        %v367 = vpop.f32.mrf.mxu0
        %v368 = vadd.f32 %v334, %v367
        %v369 = vpop.f32.mrf.mxu0
        %v370 = vadd.f32 %v334, %v369
        %371 = vdwg.mxu0
        %v372 = vmax.f32 %v368, 0.0
        %v373 = vmax.f32 %v370, 0.0
        %vm374 = vcmask 261120
        %375 = vst.msk [vmem:[%s217] sm:$0xff] %vm374, %v372
        %376 = vst.msk [vmem:[%s217 + $0x8] sm:$0xff] %vm374, %v373
        %s377 = sand.u32 %s137, 1
        %s378 = scalar_lea.sflag [#allocation4], %s377
        %s379 = sand.u32 %s137, 1
        %s380 = smul.addr %s379, 16
        %s381 = scalar_lea.vmem [#allocation3], %s380
        // Predicated region
        $region41: #{tpu_custom_call.1} parent=39 // pred_check
          %p382 = pneg %p147
        $region42: #{tpu_custom_call.1} parent=39 // pred_check_branch
          %384 = sbr.rel (%p382) target = $region44
        $region43: #{tpu_custom_call.1} parent=39 // pred_region
          %386 = vsyncadd %s378, 0
          %s387 = smul.addr %s19, 2
          %s388 = smul.addr %s387, 8
          %s389 = scalar_lea.hbm %s5, %s388
          %s390 = sshll.u32 %s381, 4
          %s391 = int_to_ptr.vmem [resolvable:$true] %s390
          %s392 = sshll.u32 %s389, 4
          %s393 = int_to_ptr.hbm [resolvable:$true] %s392
          %398 = dma.vmem_to_hbm [thread:$0]  %s391, 256, %s393, %s378, 128, 128, 8
        $region44: #{tpu_custom_call.1} parent=39 // pred_fallthru
          _
      $region40: #{tpu_custom_call.1} parent=5 // pred_fallthru
        _
      %p399 = scmp.le.s32.totalorder 2, %s14
      // Predicated region
      $region45: #{tpu_custom_call.1} parent=5 // pred_check
        %p400 = pneg %p399
      $region46: #{tpu_custom_call.1} parent=5 // pred_check_branch
        %402 = sbr.rel (%p400) target = $region48
      $region47: #{tpu_custom_call.1} parent=5 // pred_region
        %s403 = ssub.s32 %s14, 2
        // Predicated region
        $region49: #{tpu_custom_call.1} parent=47 // pred_check
          %p404 = pneg %p153
        $region50: #{tpu_custom_call.1} parent=47 // pred_check_branch
          %406 = sbr.rel (%p404) target = $region52
        $region51: #{tpu_custom_call.1} parent=47 // pred_region
          %s407 = sand.u32 %s138, 1
          %s408 = scalar_lea.sflag [#allocation4], %s407
          %s409 = sand.u32 %s138, 1
          %s410 = smul.addr %s409, 16
          %s411 = scalar_lea.vmem [#allocation3], %s410
          %413 = dma.done %s408, 256
        $region52: #{tpu_custom_call.1} parent=47 // pred_fallthru
          _
      $region48: #{tpu_custom_call.1} parent=5 // pred_fallthru
        _
    $region6: #{tpu_custom_call.1} parent=1 // loop_footer
      %s18 = sadd.s32 1, %s14
    $region7: #{tpu_custom_call.1} parent=1 // loop_footer_branch
      %13 = sbr.rel target = $region3
    $region8: #{tpu_custom_call.1} parent=1 // loop_exit
      _
    %414 = vsyncpa [#allocation4], 1
    %s415 = scalar_lea.sflag [#allocation4], 1
    %416 = vsyncpa %s415, 1

</llo_original>
